<compile_context>
chip_gen: v5e
topology: v5e:2x2
jax: 0.10.0
libtpu: 0.0.40
codegen_flags: <defaults>
</compile_context>

<pallas_src>
import jax
import jax.numpy as jnp
from jax.experimental import pallas as pl
from jax.experimental.pallas import tpu as pltpu


def _rope_kernel(w_sin_ref, w_cos_ref, o_ref, slab_ref):
    # w_sin_ref : (tS, R)    weight rows for this seq tile
    # w_cos_ref : (tS, R)    weight rows shifted by +1 (rolled) for this tile
    # o_ref     : (1, tS, 2R) output block for (batch b, seq tile s)
    # slab_ref  : (tS, 2R)   VMEM scratch, persists across grid steps
    b = pl.program_id(1)
    R = w_sin_ref.shape[1]

    @pl.when(b == 0)
    def _():
        # Compute the slab once per seq tile (batch axis is innermost).
        slab_ref[:, 0:R] = jnp.sin(w_sin_ref[...])
        slab_ref[:, R:2 * R] = jnp.cos(w_cos_ref[...])

    # Re-store the same slab for every batch row (pure HBM writeback).
    o_ref[0] = slab_ref[...]


def _pick_seq_tile(S):
    """Static seq-tile size: multiple of 8, <= 1024 rows, >= 2 tiles when S >= 16."""
    if S < 16:
        return S                      # single full-extent tile (always legal)
    half = -(-S // 2)                 # ceil(S / 2)
    half = ((half + 7) // 8) * 8      # round up to sublane multiple
    return min(1024, half)


def rotary_positional_embedding(x, weight):
    """x: (B, S) token ids (only the shape is used, matching the module).
    weight: (max_seq_len, R). Returns (B, S, 2R)."""
    B, S = x.shape
    max_seq_len, R = weight.shape
    if S > max_seq_len:
        raise ValueError(f"seq_len {S} exceeds max_seq_len {max_seq_len}")

    # cos rows == roll(weight, -1, axis=0)[:S] without a full-table rolled copy.
    if S < max_seq_len:
        w_cos = jax.lax.slice(weight, (1, 0), (S + 1, R))
    else:  # wraparound row weight[0] only needed when S == max_seq_len
        w_cos = jnp.concatenate([weight[1:], weight[:1]], axis=0)

    tS = _pick_seq_tile(S)
    n_s = pl.cdiv(S, tS)

    out = pl.pallas_call(
        _rope_kernel,
        out_shape=jax.ShapeDtypeStruct((B, S, 2 * R), weight.dtype),
        grid=(n_s, B),
        in_specs=[
            # Full weight table passed in; only block rows < S are DMA'd.
            pl.BlockSpec((tS, R), lambda s, b: (s, 0)),
            # S-row rolled slice.
            pl.BlockSpec((tS, R), lambda s, b: (s, 0)),
        ],
        out_specs=pl.BlockSpec((1, tS, 2 * R), lambda s, b: (b, s, 0)),
        scratch_shapes=[pltpu.VMEM((tS, 2 * R), weight.dtype)],
        compiler_params=pltpu.CompilerParams(
            dimension_semantics=("parallel", "arbitrary")),
    )(weight, w_cos)
    return out


if __name__ == "__main__":
    embed_dim = 256
    rotary_dim = embed_dim // 2          # 128 -> lane aligned
    max_seq_len = 8
    batch = 2
    seq_len = 8                          # sublane aligned

    key = jax.random.PRNGKey(0)
    k_w, k_x = jax.random.split(key)

    # nn.Embedding(max_seq_len, rotary_dim) with .uniform_(-1, 1)
    weight = jax.random.uniform(
        k_w, (max_seq_len, rotary_dim), dtype=jnp.float32,
        minval=-1.0, maxval=1.0)

    # x: (batch, seq_len) token ids; only its shape matters to forward()
    x = jax.random.randint(k_x, (batch, seq_len), 0, max_seq_len,
                           dtype=jnp.int32)

    out = rotary_positional_embedding(x, weight)
    out = jax.block_until_ready(out)

    # pure-JAX reference check
    ref_sin = jnp.sin(weight[:seq_len])
    ref_cos = jnp.cos(jnp.roll(weight, -1, axis=0)[:seq_len])
    ref = jnp.broadcast_to(
        jnp.concatenate([ref_sin, ref_cos], axis=-1)[None],
        (batch, seq_len, embed_dim))

    assert out.shape == (batch, seq_len, embed_dim), out.shape
    assert out.dtype == jnp.float32
    assert jnp.allclose(out, ref, atol=1e-6), "mismatch vs reference"

    print("KERNEL_OK")
</pallas_src>

<mosaic_0001>
module attributes {stable_mosaic.version = 11 : i64} {
  func.func @_rope_kernel(%arg0: i32, %arg1: i32, %arg2: memref<8x128xf32, #tpu.memory_space<vmem>>, %arg3: memref<8x128xf32, #tpu.memory_space<vmem>>, %arg4: memref<1x8x256xf32, #tpu.memory_space<vmem>>, %arg5: memref<8x256xf32, #tpu.memory_space<vmem>>) attributes {dimension_semantics = [#tpu.dimension_semantics<parallel>, #tpu.dimension_semantics<arbitrary>], iteration_bounds = array<i64: 1, 2>, scalar_prefetch = 0 : i64, scratch_operands = 1 : i64, tpu.core_type = #tpu.core_type<tc>, window_params = [{transform_indices = @transform_0, window_bounds = array<i64: 8, 128>}, {transform_indices = @transform_1, window_bounds = array<i64: 8, 128>}, {transform_indices = @transform_2, window_bounds = array<i64: 1, 8, 256>}]} {
    %c0_i32 = arith.constant 0 : i32
    %0 = arith.cmpi eq, %arg1, %c0_i32 : i32
    %1 = arith.extui %0 : i1 to i32
    %c0_i32_0 = arith.constant 0 : i32
    %2 = arith.cmpi ne, %1, %c0_i32_0 : i32
    scf.if %2 {
      %c0_5 = arith.constant 0 : index
      %c0_6 = arith.constant 0 : index
      %7 = vector.load %arg2[%c0_5, %c0_6] : memref<8x128xf32, #tpu.memory_space<vmem>>, vector<8x128xf32>
      %8 = math.sin %7 : vector<8x128xf32>
      %c0_7 = arith.constant 0 : index
      %c0_8 = arith.constant 0 : index
      %9 = vector.load %arg5[%c0_7, %c0_8] : memref<8x256xf32, #tpu.memory_space<vmem>>, vector<8x128xf32>
      tpu.vector_store %arg5[%c0_7, %c0_8], %8 {strides = array<i32>} : memref<8x256xf32, #tpu.memory_space<vmem>>, vector<8x128xf32>,
      %c0_9 = arith.constant 0 : index
      %c0_10 = arith.constant 0 : index
      %10 = vector.load %arg3[%c0_9, %c0_10] : memref<8x128xf32, #tpu.memory_space<vmem>>, vector<8x128xf32>
      %11 = math.cos %10 : vector<8x128xf32>
      %c0_11 = arith.constant 0 : index
      %c128 = arith.constant 128 : index
      %12 = vector.load %arg5[%c0_11, %c128] : memref<8x256xf32, #tpu.memory_space<vmem>>, vector<8x128xf32>
      tpu.vector_store %arg5[%c0_11, %c128], %11 {strides = array<i32>} : memref<8x256xf32, #tpu.memory_space<vmem>>, vector<8x128xf32>,
    } else {
    }
    %c0 = arith.constant 0 : index
    %c0_1 = arith.constant 0 : index
    %3 = vector.load %arg5[%c0, %c0_1] : memref<8x256xf32, #tpu.memory_space<vmem>>, vector<8x256xf32>
    %c0_2 = arith.constant 0 : index
    %c0_3 = arith.constant 0 : index
    %c0_4 = arith.constant 0 : index
    %4 = vector.load %arg4[%c0_2, %c0_3, %c0_4] : memref<1x8x256xf32, #tpu.memory_space<vmem>>, vector<1x8x256xf32>
    %5 = vector.shape_cast %4 : vector<1x8x256xf32> to vector<8x256xf32>
    %6 = vector.shape_cast %3 : vector<8x256xf32> to vector<1x8x256xf32>
    tpu.vector_store %arg4[%c0_2, %c0_3, %c0_4], %6 {strides = array<i32>} : memref<1x8x256xf32, #tpu.memory_space<vmem>>, vector<1x8x256xf32>,
    return
  }
  func.func @transform_0(%arg0: i32, %arg1: i32) -> (i32, i32) {
    %c0_i32 = arith.constant 0 : i32
    %c0_i32_0 = arith.constant 0 : i32
    return %arg0, %c0_i32 : i32, i32
  }
  func.func @transform_1(%arg0: i32, %arg1: i32) -> (i32, i32) {
    %c0_i32 = arith.constant 0 : i32
    %c0_i32_0 = arith.constant 0 : i32
    return %arg0, %c0_i32 : i32, i32
  }
  func.func @transform_2(%arg0: i32, %arg1: i32) -> (i32, i32, i32) {
    %c0_i32 = arith.constant 0 : i32
    %c0_i32_0 = arith.constant 0 : i32
    return %arg1, %arg0, %c0_i32 : i32, i32, i32
  }
}

</mosaic_0001>

<llo_original>
// kernel: tpu_custom_call.1
$region0: #{tpu_custom_call.1}
  #allocation0 [shape = 'u32[]', space=smem, size = 0x4, offset = 0x4, fixed_abs, tag = 'smem constant byte address 0x4 - core index']
  #allocation1 [shape = 'u32[72,128]{1,0:T(1,128)}', space=vmem, size = 0x9000, scoped, tag = 'internal scratch']
  #allocation2 [shape = 'f32[8,256]{1,0:T(8,128)}', space=vmem, size = 0x2000, scoped, tag = 'scratch operand']
  %s0 = inlined_call_operand.hbm [shape: f32[8,128], index: 0, kind: input, shape index: {}]
  %s1 = inlined_call_operand.hbm [shape: f32[8,128], index: 1, kind: input, shape index: {}]
  %s2 = inlined_call_operand.hbm [shape: f32[2,8,256], index: 2, kind: output, shape index: {}]
  %s3 = sld [smem:[#allocation0]]
  $region53: #{tpu_custom_call.1} parent=0
    _
  %s5 = ssub.s32 1, %s3
  %s6 = scalar_select 0, %s5, %s3
  $region1: #{tpu_custom_call.1} parent=0
    #allocation3 [shape = 'u8[4096]{0}', space=vmem, size = 0x1000, scoped, tag = 'input window, operand 0, single buffered']
    #allocation4 [shape = 's32[2]{0}', space=sflag, size = 0x8, scoped, tag = 'scoped memory for tpu_custom_call.1']
    #allocation5 [shape = 's32[2]{0}', space=sflag, size = 0x8, scoped, tag = 'scoped memory for tpu_custom_call.1']
    #allocation6 [shape = 'u8[4096]{0}', space=vmem, size = 0x1000, scoped, tag = 'input window, operand 1, single buffered']
    #allocation7 [shape = 's32[1]{0}', space=sflag, size = 0x4, scoped, tag = 'scoped memory for tpu_custom_call.1']
    #allocation8 [shape = 'u8[16384]{0}', space=vmem, size = 0x4000, scoped, tag = 'output window, operand 0']
    %7 = vsyncpa [#allocation4], 0
    %8 = vsyncpa [#allocation7], 0
    %9 = vsyncpa [#allocation5], 0
    %s10 = scalar_lea.sflag [#allocation5], 1
    %11 = vsyncpa %s10, 0
    loop: start=0, step=1, limit=4
    $region2: #{tpu_custom_call.1} parent=1 // loop_pre_header
      _
    $region3: #{tpu_custom_call.1} parent=1 // loop_header
      %s13 = sphi 0, %s17
      %p14 = scmp.ge.s32.totalorder %s13, 4
      %s20 = sphi 0, %s32
      %s21 = sphi 0, %s28
      %s22 = sphi 0, %s20
      %s23 = sphi 0, %s21
      %s24 = sphi 0, %s22
      %s25 = sphi 0, %s23
      %s35 = sphi 0, %s37
      %s38 = sphi 0, %s35
      %s39 = sphi 0, %s38
      %s55 = sphi 0, %s39
      %s61 = sphi 0, %s63
      %s64 = sphi 0, %s61
      %s65 = sphi 0, %s64
      %s81 = sphi 0, %s65
      %s89 = sphi 0, %s91
      %s92 = sphi 0, %s89
      %s93 = sphi 0, %s92
      %s109 = sphi 0, %s93
    $region4: #{tpu_custom_call.1} parent=1 // loop_header_branch
      %16 = sbr.rel (%p14) target = $region8
    $region5: #{tpu_custom_call.1} parent=1 // loop_body
      %s18 = ssub.s32 %s13, 1
      %s19 = ssub.s32 %s13, 2
      %s26 = sadd.s32 1, %s21
      %p27 = scmp.ge.s32.totalorder %s26, 2
      %s28 = scalar_select %p27, 0, %s26
      %s29 = sadd.s32 1, %s20
      %s30 = scalar_select %p27, %s29, %s20
      %p31 = scmp.ge.s32.totalorder %s30, 1
      %s32 = scalar_select %p31, 0, %s30
      %s33 = ssub.s32 %s20, %s32
      %p34 = scmp.eq.s32.totalorder %s33, 0
      %s36 = sadd.s32 %s35, 1
      %s37 = scalar_select %p34, %s35, %s36
      %p40 = pneg %p34
      %p41 = scmp.eq.s32.totalorder %s13, 1
      %p42 = por %p40, %p41
      %p43 = scmp.ne.s32.totalorder %s35, %s38
      %p44 = scmp.eq.s32.totalorder %s13, 0
      %p45 = por %p43, %p44
      %p46 = scmp.ne.s32.totalorder %s35, %s38
      %p47 = scmp.eq.s32.totalorder %s18, 1
      %p48 = por %p46, %p47
      %p49 = scmp.ne.s32.totalorder %s38, %s39
      %p50 = scmp.eq.s32.totalorder %s18, 0
      %p51 = por %p49, %p50
      %p52 = scmp.ne.s32.totalorder %s38, %s39
      %p53 = scmp.eq.s32.totalorder %s19, 1
      %p54 = por %p52, %p53
      %p56 = scmp.ne.s32.totalorder %s39, %s55
      %p57 = scmp.eq.s32.totalorder %s19, 0
      %p58 = por %p56, %p57
      %s59 = ssub.s32 %s20, %s32
      %p60 = scmp.eq.s32.totalorder %s59, 0
      %s62 = sadd.s32 %s61, 1
      %s63 = scalar_select %p60, %s61, %s62
      %p66 = pneg %p60
      %p67 = scmp.eq.s32.totalorder %s13, 1
      %p68 = por %p66, %p67
      %p69 = scmp.ne.s32.totalorder %s61, %s64
      %p70 = scmp.eq.s32.totalorder %s13, 0
      %p71 = por %p69, %p70
      %p72 = scmp.ne.s32.totalorder %s61, %s64
      %p73 = scmp.eq.s32.totalorder %s18, 1
      %p74 = por %p72, %p73
      %p75 = scmp.ne.s32.totalorder %s64, %s65
      %p76 = scmp.eq.s32.totalorder %s18, 0
      %p77 = por %p75, %p76
      %p78 = scmp.ne.s32.totalorder %s64, %s65
      %p79 = scmp.eq.s32.totalorder %s19, 1
      %p80 = por %p78, %p79
      %p82 = scmp.ne.s32.totalorder %s65, %s81
      %p83 = scmp.eq.s32.totalorder %s19, 0
      %p84 = por %p82, %p83
      %s85 = ssub.s32 %s21, %s28
      %s86 = ssub.s32 %s20, %s32
      %s87 = sor.u32 %s85, %s86
      %p88 = scmp.eq.s32.totalorder %s87, 0
      %s90 = sadd.s32 %s89, 1
      %s91 = scalar_select %p88, %s89, %s90
      %p94 = pneg %p88
      %p95 = scmp.eq.s32.totalorder %s13, 1
      %p96 = por %p94, %p95
      %p97 = scmp.ne.s32.totalorder %s89, %s92
      %p98 = scmp.eq.s32.totalorder %s13, 0
      %p99 = por %p97, %p98
      %p100 = scmp.ne.s32.totalorder %s89, %s92
      %p101 = scmp.eq.s32.totalorder %s18, 1
      %p102 = por %p100, %p101
      %p103 = scmp.ne.s32.totalorder %s92, %s93
      %p104 = scmp.eq.s32.totalorder %s18, 0
      %p105 = por %p103, %p104
      %p106 = scmp.ne.s32.totalorder %s92, %s93
      %p107 = scmp.eq.s32.totalorder %s19, 1
      %p108 = por %p106, %p107
      %p110 = scmp.ne.s32.totalorder %s93, %s109
      %p111 = scmp.eq.s32.totalorder %s19, 0
      %p112 = por %p110, %p111
      %p113 = scmp.le.s32.totalorder 1, %s13
      %p114 = scmp.lt.s32.totalorder %s13, 3
      %p115 = pnand %p113, %p114
      %p116 = pneg %p115
      // Predicated region
      $region9: #{tpu_custom_call.1} parent=5 // pred_check
        _
      $region10: #{tpu_custom_call.1} parent=5 // pred_check_branch
        %118 = sbr.rel (%p115) target = $region12
      $region11: #{tpu_custom_call.1} parent=5 // pred_region
        %s119 = ssub.s32 %s13, 1
        // Predicated region
        $region13: #{tpu_custom_call.1} parent=11 // pred_check
          %p120 = pneg %p51
        $region14: #{tpu_custom_call.1} parent=11 // pred_check_branch
          %122 = sbr.rel (%p120) target = $region16
        $region15: #{tpu_custom_call.1} parent=11 // pred_region
          %124 = vsyncadd [#allocation4], 0
          %s125 = smul.addr %s22, 8
          %s126 = scalar_lea.hbm %s0, %s125
          %s128 = sshll.u32 %s126, 4
          %s129 = int_to_ptr.hbm [resolvable:$true] %s128
          %s130 = sshll.u32 [#allocation3], 4
          %s131 = int_to_ptr.vmem [resolvable:$true] %s130
          %133 = dma.hbm_to_vmem [thread:$0]  %s129, 128, %s131, [#allocation4]
        $region16: #{tpu_custom_call.1} parent=11 // pred_fallthru
          _
        // Predicated region
        $region17: #{tpu_custom_call.1} parent=11 // pred_check
          %p134 = pneg %p77
        $region18: #{tpu_custom_call.1} parent=11 // pred_check_branch
          %136 = sbr.rel (%p134) target = $region20
        $region19: #{tpu_custom_call.1} parent=11 // pred_region
          %138 = vsyncadd [#allocation7], 0
          %s139 = smul.addr %s22, 8
          %s140 = scalar_lea.hbm %s1, %s139
          %s142 = sshll.u32 %s140, 4
          %s143 = int_to_ptr.hbm [resolvable:$true] %s142
          %s144 = sshll.u32 [#allocation6], 4
          %s145 = int_to_ptr.vmem [resolvable:$true] %s144
          %147 = dma.hbm_to_vmem [thread:$0]  %s143, 128, %s145, [#allocation7]
        $region20: #{tpu_custom_call.1} parent=11 // pred_fallthru
          _
      $region12: #{tpu_custom_call.1} parent=5 // pred_fallthru
        _
      %p148 = scmp.lt.s32.totalorder %s13, 2
      // Predicated region
      $region21: #{tpu_custom_call.1} parent=5 // pred_check
        %p149 = pneg %p148
      $region22: #{tpu_custom_call.1} parent=5 // pred_check_branch
        %151 = sbr.rel (%p149) target = $region24
      $region23: #{tpu_custom_call.1} parent=5 // pred_region
        _
      $region24: #{tpu_custom_call.1} parent=5 // pred_fallthru
        _
      %p152 = scmp.le.s32.totalorder 1, %s13
      %p153 = scmp.lt.s32.totalorder %s13, 3
      %p154 = pnand %p152, %p153
      %p155 = pneg %p154
      // Predicated region
      $region25: #{tpu_custom_call.1} parent=5 // pred_check
        _
      $region26: #{tpu_custom_call.1} parent=5 // pred_check_branch
        %157 = sbr.rel (%p154) target = $region28
      $region27: #{tpu_custom_call.1} parent=5 // pred_region
        %s158 = ssub.s32 %s13, 1
        // Predicated region
        $region29: #{tpu_custom_call.1} parent=27 // pred_check
          %p159 = pneg %p51
        $region30: #{tpu_custom_call.1} parent=27 // pred_check_branch
          %161 = sbr.rel (%p159) target = $region32
        $region31: #{tpu_custom_call.1} parent=27 // pred_region
          %163 = dma.done [#allocation4], 128
        $region32: #{tpu_custom_call.1} parent=27 // pred_fallthru
          _
        // Predicated region
        $region33: #{tpu_custom_call.1} parent=27 // pred_check
          %p164 = pneg %p77
        $region34: #{tpu_custom_call.1} parent=27 // pred_check_branch
          %166 = sbr.rel (%p164) target = $region36
        $region35: #{tpu_custom_call.1} parent=27 // pred_region
          %168 = dma.done [#allocation7], 128
        $region36: #{tpu_custom_call.1} parent=27 // pred_fallthru
          _
        %p169 = pneg %p51
        %p170 = pneg %p48
        %p171 = pneg %p77
        %p172 = pneg %p74
        %p173 = pneg %p105
        %p174 = pneg %p102
        %s175 = sand.u32 %s92, 1
        %s176 = scalar_lea.sflag [#allocation5], %s175
        %s177 = sand.u32 %s92, 1
        %s178 = smul.addr %s177, 16
        %s179 = scalar_lea.vmem [#allocation8], %s178
        %p180 = scmp.eq.s32.totalorder %s23, 0
        // Predicated region
        $region37: #{tpu_custom_call.1} parent=27 // pred_check
          %p181 = pneg %p180
        $region38: #{tpu_custom_call.1} parent=27 // pred_check_branch
          %183 = sbr.rel (%p181) target = $region40
        $region39: #{tpu_custom_call.1} parent=27 // pred_region
          %v184 = vld [vmem:[#allocation3] sm:$0xff]
          %v185 = vand.u32 2147483647, %v184
          %vm186 = vcmp.le.f32.partialorder %v185, 0.7853982
          %vm187 = vcmp.lt.s32.totalorder %v184, 0
          %v188 = vand.u32 %v184, 2139095040
          %v189 = vshrl.u32 %v188, 23
          %v190 = vsub.s32 %v189, 127
          %v191 = vand.u32 2147483647, %v184
          %v192 = vand.u32 %v191, 8388607
          %v193 = vor.u32 %v192, 8388608
          %v194 = vsub.s32 0, %v193
          %v195 = vadd.s32 %v190, 1
          %vm196 = vcmp.gt.s32.totalorder %v195, 0
          %v197 = vsel %vm196, %v195, 0
          %v198 = vshrl.u32 %v197, 5
          %v199 = vand.u32 %v197, 31
          %v200 = vsub.s32 32, %v199
          %v201 = vshrl.u32 683565275, %v200
          %v202 = vshll.u32 683565275, %v199
          %v203 = vshrl.u32 2475754826, %v200
          %v204 = vor.u32 %v202, %v203
          %v205 = vshll.u32 2475754826, %v199
          %v206 = vshrl.u32 2131351028, %v200
          %v207 = vor.u32 %v205, %v206
          %v208 = vshll.u32 2131351028, %v199
          %v209 = vshrl.u32 2102212464, %v200
          %v210 = vor.u32 %v208, %v209
          %v211 = vshll.u32 2102212464, %v199
          %v212 = vshrl.u32 920167782, %v200
          %v213 = vor.u32 %v211, %v212
          %v214 = vshll.u32 920167782, %v199
          %v215 = vshrl.u32 1326507024, %v200
          %v216 = vor.u32 %v214, %v215
          %vm217 = vcmp.lt.s32.totalorder %v198, 1
          %vm218 = vcmp.lt.s32.totalorder %v198, 2
          %vm219 = vcmp.lt.s32.totalorder %v198, 3
          %vm220 = vcmp.lt.s32.totalorder %v198, 4
          %v221 = vsel %vm217, %v201, %v204
          %v222 = vsel %vm220, %v210, 2102212464
          %v223 = vsel %vm219, %v207, %v222
          %v224 = vsel %vm218, %v221, %v223
          %v225 = vsel %vm217, %v204, %v207
          %v226 = vsel %vm220, %v213, 920167782
          %v227 = vsel %vm219, %v210, %v226
          %v228 = vsel %vm218, %v225, %v227
          %v229 = vsel %vm217, %v207, %v210
          %v230 = vsel %vm220, %v216, 1326507024
          %v231 = vsel %vm219, %v213, %v230
          %v232 = vsel %vm218, %v229, %v231
          %v233 = vshll.u32 %v193, 8
          %v234 = vand.u32 %v233, 65535
          %v235 = vshrl.u32 %v233, 16
          %v236 = vand.u32 %v232, 65535
          %v237 = vshrl.u32 %v232, 16
          %v238 = vmul.u32 %v234, %v236
          %v239 = vmul.u32 %v234, %v237
          %v240 = vmul.u32 %v235, %v236
          %v241 = vmul.u32 %v235, %v237
          %v242 = vshll.u32 %v239, 16
          %v243 = vshrl.u32 %v239, 16
          %v244 = vshll.u32 %v240, 16
          %v245 = vshrl.u32 %v240, 16
          %vm246 = vc.u32 %v238, %v242
          %v247 = vsel %vm246, 1, 0
          %v248 = vadd.s32 %v238, %v242
          %v249 = vadd.s32 %v241, %v247
          %vm250 = vc.u32 %v248, %v244
          %v251 = vsel %vm250, 1, 0
          %v252 = vadd.s32 %v248, %v244
          %v253 = vadd.s32 %v249, %v251
          %v254 = vadd.s32 %v253, %v243
          %v255 = vadd.s32 %v254, %v245
          %v256 = vand.u32 %v233, 65535
          %v257 = vshrl.u32 %v233, 16
          %v258 = vand.u32 %v228, 65535
          %v259 = vshrl.u32 %v228, 16
          %v260 = vmul.u32 %v256, %v258
          %v261 = vmul.u32 %v256, %v259
          %v262 = vmul.u32 %v257, %v258
          %v263 = vmul.u32 %v257, %v259
          %v264 = vshll.u32 %v261, 16
          %v265 = vshrl.u32 %v261, 16
          %v266 = vshll.u32 %v262, 16
          %v267 = vshrl.u32 %v262, 16
          %vm268 = vc.u32 %v260, %v264
          %v269 = vsel %vm268, 1, 0
          %v270 = vadd.s32 %v260, %v264
          %v271 = vadd.s32 %v263, %v269
          %vm272 = vc.u32 %v270, %v266
          %v273 = vsel %vm272, 1, 0
          %v274 = vadd.s32 %v270, %v266
          %v275 = vadd.s32 %v271, %v273
          %v276 = vadd.s32 %v275, %v265
          %v277 = vadd.s32 %v276, %v267
          %v278 = vmul.u32 %v233, %v224
          %v279 = vadd.s32 %v255, %v274
          %vm280 = vc.u32 %v255, %v274
          %v281 = vadd.s32 %v277, 1
          %v282 = vsel %vm280, %v281, %v277
          %v283 = vadd.s32 %v278, %v282
          %v284 = vadd.s32 %v283, 536870912
          %v285 = vshrl.u32 %v284, 30
          %v286 = vshll.u32 %v285, 30
          %v287 = vsub.s32 %v283, %v286
          %vm288 = vcmp.lt.s32.totalorder %v287, 0
          %v289 = vsub.s32 0, %v287
          %v290 = vsel %vm288, %v289, %v287
          %v291 = vclz %v290
          %v292 = vsub.s32 %v291, 2
          %vm293 = vcmp.gt.s32.totalorder 0, %v292
          %v294 = vsel %vm293, 0, %v292
          %v295 = vsub.s32 32, %v294
          %v296 = vshll.u32 %v287, %v294
          %v297 = vshrl.u32 %v279, %v295
          %v298 = vor.u32 %v296, %v297
          %v299 = vsub.s32 4294967266, %v294
          %v300 = vadd.s32 %v299, 127
          %v301 = vshll.u32 %v300, 23
          %v302 = vor.u32 4788187, %v301
          %v303 = vand.u32 2147483647, %v302
          %v305 = vcvt.s32.f32 %v298
          %v306 = vmul.f32 %v305, %v303
          %v307 = vxor.u32 %v306, 2147483648
          %v308 = vsel %vm187, %v307, %v306
          %v309 = vsub.s32 4, %v285
          %v310 = vsel %vm187, %v309, %v285
          %v311 = vsel %vm186, %v184, %v308
          %v312 = vsel %vm186, 0, %v310
          %v313 = vmul.f32 %v311, %v311
          %v314 = vmul.f32 %v313, -0.001358992
          %v315 = vadd.f32 %v314, 0.041655596
          %v316 = vmul.f32 %v313, %v315
          %v317 = vadd.f32 %v316, -0.4999988
          %v318 = vmul.f32 %v313, %v317
          %v319 = vadd.f32 1.0, %v318
          %v320 = vmul.f32 %v311, %v311
          %v321 = vmul.f32 %v320, -0.00019511016
          %v322 = vadd.f32 %v321, 0.008332121
          %v323 = vmul.f32 %v320, %v322
          %v324 = vadd.f32 %v323, -0.16666654
          %v325 = vmul.f32 %v320, %v324
          %v326 = vadd.f32 %v325, 1.0
          %v327 = vmul.f32 %v326, %v311
          %vm328 = vweird.f32 %v184
          %v329 = vadd.s32 %v312, 3
          %v330 = vand.u32 %v329, 3
          %vm331 = vcmp.lt.s32.totalorder %v330, 2
          %vm332 = vcmp.eq.s32.totalorder %v330, 0
          %v333 = vxor.u32 %v327, 2147483648
          %v334 = vsel %vm332, %v319, %v333
          %vm335 = vcmp.eq.s32.totalorder %v330, 2
          %v336 = vxor.u32 %v319, 2147483648
          %v337 = vsel %vm335, %v336, %v327
          %v338 = vsel %vm331, %v334, %v337
          %v339 = vsel %vm328, nan, %v338
          %340 = vst [vmem:[#allocation2] sm:$0xff] %v339
          %v341 = vld [vmem:[#allocation6] sm:$0xff]
          %v342 = vand.u32 2147483647, %v341
          %vm343 = vcmp.le.f32.partialorder %v342, 0.7853982
          %vm344 = vcmp.lt.s32.totalorder %v341, 0
          %v345 = vand.u32 %v341, 2139095040
          %v346 = vshrl.u32 %v345, 23
          %v347 = vsub.s32 %v346, 127
          %v348 = vand.u32 2147483647, %v341
          %v349 = vand.u32 %v348, 8388607
          %v350 = vor.u32 %v349, 8388608
          %v351 = vsub.s32 0, %v350
          %v352 = vadd.s32 %v347, 1
          %vm353 = vcmp.gt.s32.totalorder %v352, 0
          %v354 = vsel %vm353, %v352, 0
          %v355 = vshrl.u32 %v354, 5
          %v356 = vand.u32 %v354, 31
          %v357 = vsub.s32 32, %v356
          %v358 = vshrl.u32 683565275, %v357
          %v359 = vshll.u32 683565275, %v356
          %v360 = vshrl.u32 2475754826, %v357
          %v361 = vor.u32 %v359, %v360
          %v362 = vshll.u32 2475754826, %v356
          %v363 = vshrl.u32 2131351028, %v357
          %v364 = vor.u32 %v362, %v363
          %v365 = vshll.u32 2131351028, %v356
          %v366 = vshrl.u32 2102212464, %v357
          %v367 = vor.u32 %v365, %v366
          %v368 = vshll.u32 2102212464, %v356
          %v369 = vshrl.u32 920167782, %v357
          %v370 = vor.u32 %v368, %v369
          %v371 = vshll.u32 920167782, %v356
          %v372 = vshrl.u32 1326507024, %v357
          %v373 = vor.u32 %v371, %v372
          %vm374 = vcmp.lt.s32.totalorder %v355, 1
          %vm375 = vcmp.lt.s32.totalorder %v355, 2
          %vm376 = vcmp.lt.s32.totalorder %v355, 3
          %vm377 = vcmp.lt.s32.totalorder %v355, 4
          %v378 = vsel %vm374, %v358, %v361
          %v379 = vsel %vm377, %v367, 2102212464
          %v380 = vsel %vm376, %v364, %v379
          %v381 = vsel %vm375, %v378, %v380
          %v382 = vsel %vm374, %v361, %v364
          %v383 = vsel %vm377, %v370, 920167782
          %v384 = vsel %vm376, %v367, %v383
          %v385 = vsel %vm375, %v382, %v384
          %v386 = vsel %vm374, %v364, %v367
          %v387 = vsel %vm377, %v373, 1326507024
          %v388 = vsel %vm376, %v370, %v387
          %v389 = vsel %vm375, %v386, %v388
          %v390 = vshll.u32 %v350, 8
          %v391 = vand.u32 %v390, 65535
          %v392 = vshrl.u32 %v390, 16
          %v393 = vand.u32 %v389, 65535
          %v394 = vshrl.u32 %v389, 16
          %v395 = vmul.u32 %v391, %v393
          %v396 = vmul.u32 %v391, %v394
          %v397 = vmul.u32 %v392, %v393
          %v398 = vmul.u32 %v392, %v394
          %v399 = vshll.u32 %v396, 16
          %v400 = vshrl.u32 %v396, 16
          %v401 = vshll.u32 %v397, 16
          %v402 = vshrl.u32 %v397, 16
          %vm403 = vc.u32 %v395, %v399
          %v404 = vsel %vm403, 1, 0
          %v405 = vadd.s32 %v395, %v399
          %v406 = vadd.s32 %v398, %v404
          %vm407 = vc.u32 %v405, %v401
          %v408 = vsel %vm407, 1, 0
          %v409 = vadd.s32 %v405, %v401
          %v410 = vadd.s32 %v406, %v408
          %v411 = vadd.s32 %v410, %v400
          %v412 = vadd.s32 %v411, %v402
          %v413 = vand.u32 %v390, 65535
          %v414 = vshrl.u32 %v390, 16
          %v415 = vand.u32 %v385, 65535
          %v416 = vshrl.u32 %v385, 16
          %v417 = vmul.u32 %v413, %v415
          %v418 = vmul.u32 %v413, %v416
          %v419 = vmul.u32 %v414, %v415
          %v420 = vmul.u32 %v414, %v416
          %v421 = vshll.u32 %v418, 16
          %v422 = vshrl.u32 %v418, 16
          %v423 = vshll.u32 %v419, 16
          %v424 = vshrl.u32 %v419, 16
          %vm425 = vc.u32 %v417, %v421
          %v426 = vsel %vm425, 1, 0
          %v427 = vadd.s32 %v417, %v421
          %v428 = vadd.s32 %v420, %v426
          %vm429 = vc.u32 %v427, %v423
          %v430 = vsel %vm429, 1, 0
          %v431 = vadd.s32 %v427, %v423
          %v432 = vadd.s32 %v428, %v430
          %v433 = vadd.s32 %v432, %v422
          %v434 = vadd.s32 %v433, %v424
          %v435 = vmul.u32 %v390, %v381
          %v436 = vadd.s32 %v412, %v431
          %vm437 = vc.u32 %v412, %v431
          %v438 = vadd.s32 %v434, 1
          %v439 = vsel %vm437, %v438, %v434
          %v440 = vadd.s32 %v435, %v439
          %v441 = vadd.s32 %v440, 536870912
          %v442 = vshrl.u32 %v441, 30
          %v443 = vshll.u32 %v442, 30
          %v444 = vsub.s32 %v440, %v443
          %vm445 = vcmp.lt.s32.totalorder %v444, 0
          %v446 = vsub.s32 0, %v444
          %v447 = vsel %vm445, %v446, %v444
          %v448 = vclz %v447
          %v449 = vsub.s32 %v448, 2
          %vm450 = vcmp.gt.s32.totalorder 0, %v449
          %v451 = vsel %vm450, 0, %v449
          %v452 = vsub.s32 32, %v451
          %v453 = vshll.u32 %v444, %v451
          %v454 = vshrl.u32 %v436, %v452
          %v455 = vor.u32 %v453, %v454
          %v456 = vsub.s32 4294967266, %v451
          %v457 = vadd.s32 %v456, 127
          %v458 = vshll.u32 %v457, 23
          %v459 = vor.u32 4788187, %v458
          %v460 = vand.u32 2147483647, %v459
          %v462 = vcvt.s32.f32 %v455
          %v463 = vmul.f32 %v462, %v460
          %v464 = vxor.u32 %v463, 2147483648
          %v465 = vsel %vm344, %v464, %v463
          %v466 = vsub.s32 4, %v442
          %v467 = vsel %vm344, %v466, %v442
          %v468 = vsel %vm343, %v341, %v465
          %v469 = vsel %vm343, 0, %v467
          %v470 = vmul.f32 %v468, %v468
          %v471 = vmul.f32 %v470, -0.001358992
          %v472 = vadd.f32 %v471, 0.041655596
          %v473 = vmul.f32 %v470, %v472
          %v474 = vadd.f32 %v473, -0.4999988
          %v475 = vmul.f32 %v470, %v474
          %v476 = vadd.f32 1.0, %v475
          %v477 = vmul.f32 %v468, %v468
          %v478 = vmul.f32 %v477, -0.00019511016
          %v479 = vadd.f32 %v478, 0.008332121
          %v480 = vmul.f32 %v477, %v479
          %v481 = vadd.f32 %v480, -0.16666654
          %v482 = vmul.f32 %v477, %v481
          %v483 = vadd.f32 %v482, 1.0
          %v484 = vmul.f32 %v483, %v468
          %vm485 = vweird.f32 %v341
          %v486 = vand.u32 %v469, 3
          %vm487 = vcmp.lt.s32.totalorder %v486, 2
          %vm488 = vcmp.eq.s32.totalorder %v486, 0
          %v489 = vxor.u32 %v484, 2147483648
          %v490 = vsel %vm488, %v476, %v489
          %vm491 = vcmp.eq.s32.totalorder %v486, 2
          %v492 = vxor.u32 %v476, 2147483648
          %v493 = vsel %vm491, %v492, %v484
          %v494 = vsel %vm487, %v490, %v493
          %v495 = vsel %vm485, nan, %v494
          %496 = vst [vmem:[#allocation2 + $0x8] sm:$0xff] %v495
        $region40: #{tpu_custom_call.1} parent=27 // pred_fallthru
          _
        %v497 = vld [vmem:[#allocation2] sm:$0xff]
        %v498 = vld [vmem:[#allocation2 + $0x8] sm:$0xff]
        %499 = vst [vmem:[%s179] sm:$0xff] %v497
        %500 = vst [vmem:[%s179 + $0x8] sm:$0xff] %v498
        %s501 = sand.u32 %s92, 1
        %s502 = scalar_lea.sflag [#allocation5], %s501
        %s503 = sand.u32 %s92, 1
        %s504 = smul.addr %s503, 16
        %s505 = scalar_lea.vmem [#allocation8], %s504
        // Predicated region
        $region41: #{tpu_custom_call.1} parent=27 // pred_check
          %p506 = pneg %p102
        $region42: #{tpu_custom_call.1} parent=27 // pred_check_branch
          %508 = sbr.rel (%p506) target = $region44
        $region43: #{tpu_custom_call.1} parent=27 // pred_region
          %510 = vsyncadd %s502, 0
          %s511 = smul.addr %s22, 2
          %s512 = smul.addr %s23, 2
          %s513 = sadd.s32 %s511, %s512
          %s514 = smul.addr %s513, 8
          %s515 = scalar_lea.hbm %s2, %s514
          %s517 = sshll.u32 %s505, 4
          %s518 = int_to_ptr.vmem [resolvable:$true] %s517
          %s519 = sshll.u32 %s515, 4
          %s520 = int_to_ptr.hbm [resolvable:$true] %s519
          %522 = dma.vmem_to_hbm [thread:$0]  %s518, 256, %s520, %s502
        $region44: #{tpu_custom_call.1} parent=27 // pred_fallthru
          _
      $region28: #{tpu_custom_call.1} parent=5 // pred_fallthru
        _
      %p523 = scmp.le.s32.totalorder 2, %s13
      // Predicated region
      $region45: #{tpu_custom_call.1} parent=5 // pred_check
        %p524 = pneg %p523
      $region46: #{tpu_custom_call.1} parent=5 // pred_check_branch
        %526 = sbr.rel (%p524) target = $region48
      $region47: #{tpu_custom_call.1} parent=5 // pred_region
        %s527 = ssub.s32 %s13, 2
        // Predicated region
        $region49: #{tpu_custom_call.1} parent=47 // pred_check
          %p528 = pneg %p108
        $region50: #{tpu_custom_call.1} parent=47 // pred_check_branch
          %530 = sbr.rel (%p528) target = $region52
        $region51: #{tpu_custom_call.1} parent=47 // pred_region
          %s531 = sand.u32 %s93, 1
          %s532 = scalar_lea.sflag [#allocation5], %s531
          %s533 = sand.u32 %s93, 1
          %s534 = smul.addr %s533, 16
          %s535 = scalar_lea.vmem [#allocation8], %s534
          %537 = dma.done %s532, 256
        $region52: #{tpu_custom_call.1} parent=47 // pred_fallthru
          _
      $region48: #{tpu_custom_call.1} parent=5 // pred_fallthru
        _
    $region6: #{tpu_custom_call.1} parent=1 // loop_footer
      %s17 = sadd.s32 1, %s13
    $region7: #{tpu_custom_call.1} parent=1 // loop_footer_branch
      %12 = sbr.rel target = $region3
    $region8: #{tpu_custom_call.1} parent=1 // loop_exit
      _
    %538 = vsyncpa [#allocation4], 1
    %s539 = scalar_lea.sflag [#allocation4], 1
    %540 = vsyncpa %s539, 1
    %541 = vsyncpa [#allocation7], 1
    %542 = vsyncpa [#allocation5], 1
    %s543 = scalar_lea.sflag [#allocation5], 1
    %544 = vsyncpa %s543, 1

</llo_original>
